<compile_context>
chip_gen: v6e
topology: v6e:2x2x1
jax: 0.10.0
libtpu: 0.0.40
codegen_flags: <defaults>
</compile_context>

<pallas_src>
import math

import jax
import jax.numpy as jnp
from jax import lax
from jax.experimental import pallas as pl
from jax.experimental.pallas import tpu as pltpu

_EPS = 1e-12  # F.normalize default eps


def _round_up(x: int, m: int) -> int:
    return ((x + m - 1) // m) * m


def _vmem_capacity_bytes() -> int:
    """Physical VMEM of the current chip; conservative (v7x) fallback."""
    try:
        cap = int(getattr(pltpu.get_tpu_info(), "vmem_capacity_bytes", 0))
        if cap > 0:
            return cap
    except Exception:
        pass
    return 64 << 20


def _choose_tile_c(C_pad: int, D: int, k: int, B: int,
                   w_item: int, x_item: int, out_item: int,
                   vmem_cap: int) -> int:
    """Largest power-of-two multiple of 128 whose triple-buffered weight tile
    plus double-buffered out tile plus the resident feature block fits in
    ~45% of physical VMEM (headroom for compiler-internal scratch)."""
    budget = int(vmem_cap * 0.45)

    def need(t):
        return (3 * k * D * t * w_item        # triple-buffered weight tiles
                + 2 * B * t * out_item        # double-buffered out tiles
                + 2 * B * D * x_item)         # resident normalized features

    tile = 4096
    while tile > 128 and need(tile) > budget:
        tile //= 2
    return max(128, min(tile, C_pad))


def _make_kernel(k: int):
    def kernel(x_ref, w_ref, o_ref):
        xn = x_ref[...]                                   # (B, D), pre-normalized
        cos = None
        for kk in range(k):                               # k small (3): static unroll
            # (B, D) @ (D, tile_c): no transpose, f32 accumulation on the MXU.
            cos_k = jnp.dot(xn, w_ref[kk],
                            preferred_element_type=jnp.float32)
            cos = cos_k if cos is None else jnp.maximum(cos, cos_k)
        o_ref[...] = cos.astype(o_ref.dtype)

    return kernel


def arc_margin_sub_center2(features, weight, *, out_features, k=3,
                           tile_c=None, matmul_dtype=jnp.bfloat16,
                           out_dtype=jnp.float32):
    """features: (B, in_features), weight: (out_features*k, in_features).
    Returns (B, out_features) cosine logits (max over the k sub-centers)."""
    B, D = features.shape
    CK, D2 = weight.shape
    C = out_features
    assert D == D2 and CK == C * k

    w_item = jnp.dtype(matmul_dtype).itemsize
    x_item = w_item
    out_item = jnp.dtype(out_dtype).itemsize

    # ---- wrapper-side normalization: f32 math, single cast ------------------
    xf = features.astype(jnp.float32)
    xn = (xf * lax.rsqrt(jnp.maximum(jnp.sum(xf * xf, axis=-1, keepdims=True),
                                     _EPS * _EPS))).astype(matmul_dtype)

    wf = weight.astype(jnp.float32).reshape(C, k, D)
    wn = wf * lax.rsqrt(jnp.maximum(jnp.sum(wf * wf, axis=-1, keepdims=True),
                                    _EPS * _EPS))
    # (C, k, D) -> (k, D, C): sub-center major, class axis lane-dense.
    # TODO(synk): in production store the parameter directly as (k, D, C) in
    # matmul_dtype (fp8-e4m3 on v7x after accuracy validation) so this
    # per-call normalize/transpose HBM pass over W disappears.
    wn = jnp.transpose(wn, (1, 2, 0)).astype(matmul_dtype)

    # ---- tiling --------------------------------------------------------------
    C_pad = _round_up(C, 128)                 # lane-dense output, minimal padding
    vmem_cap = _vmem_capacity_bytes()
    if tile_c is None:
        tile_c = _choose_tile_c(C_pad, D, k, B, w_item, x_item, out_item, vmem_cap)
    tile_c = min(tile_c, C_pad)
    n_tiles = pl.cdiv(C_pad, tile_c)
    C_w = n_tiles * tile_c                    # weight padded: its DMA never reads OOB
    if C_w != C:
        wn = jnp.pad(wn, ((0, 0), (0, 0), (0, C_w - C)))

    # ---- VMEM budget / advisory cost hint ------------------------------------
    w_tile_bytes = k * D * tile_c * w_item
    out_tile_bytes = B * tile_c * out_item
    x_bytes = B * D * x_item
    need = 3 * w_tile_bytes + 2 * out_tile_bytes + 2 * x_bytes
    vmem_limit = int(min(max(need + (8 << 20), 32 << 20),
                         max(vmem_cap - (16 << 20), 32 << 20)))

    cost = pl.CostEstimate(
        flops=2 * B * C_w * k * D,
        transcendentals=0,
        bytes_accessed=(k * D * C_w * w_item
                        + B * D * x_item
                        + B * C_pad * out_item),
    )

    # Streamed weight tiles: triple-buffer to hide DMA issue latency behind
    # the short per-tile compute.  Guarded so an older BlockSpec signature
    # (no pipeline_mode) or a single-tile grid still runs cleanly.
    w_idx = lambda j: (0, 0, j)
    w_spec = pl.BlockSpec((k, D, tile_c), w_idx)
    if n_tiles > 1:
        try:
            w_spec = pl.BlockSpec((k, D, tile_c), w_idx,
                                  pipeline_mode=pl.Buffered(3))
        except TypeError:
            pass

    out = pl.pallas_call(
        _make_kernel(k),
        out_shape=jax.ShapeDtypeStruct((B, C_pad), out_dtype),
        grid_spec=pltpu.PrefetchScalarGridSpec(
            num_scalar_prefetch=0,
            grid=(n_tiles,),
            in_specs=[
                pl.BlockSpec((B, D), lambda j: (0, 0)),   # resident (constant index)
                w_spec,                                   # streamed weight tiles
            ],
            out_specs=pl.BlockSpec((B, tile_c), lambda j: (0, j)),
        ),
        compiler_params=pltpu.CompilerParams(
            dimension_semantics=("parallel",),
            vmem_limit_bytes=vmem_limit),
        cost_estimate=cost,
    )(xn, wn)

    # TODO(synk): for very large batches add a second "parallel" grid axis over
    # B (tile ~128-256 rows) so the (B, tile_c) f32 out tile stays small.
    return out if C_pad == C else out[:, :C]


def arc_margin_sub_center2_ref(features, weight, *, out_features, k=3):
    """Pure-JAX reference mirroring the PyTorch forward (f32 throughout)."""
    xn = features / jnp.maximum(
        jnp.linalg.norm(features, axis=1, keepdims=True), _EPS)
    wn = weight / jnp.maximum(
        jnp.linalg.norm(weight, axis=1, keepdims=True), _EPS)
    cos_all = xn @ wn.T                                   # (B, C*k)
    cos_all = cos_all.reshape(-1, out_features, k)        # class-major rows
    return jnp.max(cos_all, axis=2)


def _run_case(key, batch, in_features, out_features, k, tile_c=None):
    kx, kw = jax.random.split(key, 2)
    # reset_parameters(): W ~ Uniform(-stdv, stdv), stdv = 1/sqrt(in_features)
    stdv = 1.0 / math.sqrt(in_features)
    W = jax.random.uniform(kw, (out_features * k, in_features),
                           minval=-stdv, maxval=stdv, dtype=jnp.float32)
    x = jax.random.normal(kx, (batch, in_features), dtype=jnp.float32)

    ref = arc_margin_sub_center2_ref(x, W, out_features=out_features, k=k)

    # Default path: pre-normalized bf16 operands on the MXU, f32 accumulator.
    out_bf16 = jax.block_until_ready(
        arc_margin_sub_center2(x, W, out_features=out_features, k=k,
                               tile_c=tile_c))
    assert out_bf16.shape == (batch, out_features)
    assert jnp.allclose(out_bf16, ref, atol=2e-2, rtol=0.0), \
        f"bf16 path max abs err = {jnp.max(jnp.abs(out_bf16 - ref))}"

    # f32 matmul path: tight check against the pure-JAX reference.
    out_f32 = jax.block_until_ready(
        arc_margin_sub_center2(x, W, out_features=out_features, k=k,
                               tile_c=tile_c, matmul_dtype=jnp.float32))
    assert jnp.allclose(out_f32, ref, atol=1e-4, rtol=1e-4), \
        f"f32 path max abs err = {jnp.max(jnp.abs(out_f32 - ref))}"


if __name__ == "__main__":
    key = jax.random.PRNGKey(0)
    k1, k2 = jax.random.split(key, 2)

    # Small shapes consistent with the module.
    _run_case(k1, batch=8, in_features=32, out_features=16, k=3)

    # Multi-tile case: exercises class padding (333 -> 384), a partial last
    # output block (tile_c=256 does not divide 384) and the Buffered(3) path.
    _run_case(k2, batch=8, in_features=128, out_features=333, k=3, tile_c=256)

    print("KERNEL_OK")
</pallas_src>

<mosaic_0001>
module attributes {stable_mosaic.version = 11 : i64} {
  func.func @kernel(%arg0: i32, %arg1: memref<8x32xbf16, #tpu.memory_space<vmem>>, %arg2: memref<3x32x128xbf16, #tpu.memory_space<vmem>>, %arg3: memref<8x128xf32, #tpu.memory_space<vmem>>) attributes {dimension_semantics = [#tpu.dimension_semantics<parallel>], iteration_bounds = array<i64: 1>, scalar_prefetch = 0 : i64, scratch_operands = 0 : i64, tpu.core_type = #tpu.core_type<tc>, window_params = [{pipeline_mode = #tpu.pipeline_mode<synchronous>, transform_indices = @transform_0, window_bounds = array<i64: 8, 32>}, {transform_indices = @transform_1, window_bounds = array<i64: 3, 32, 128>}, {transform_indices = @transform_2, window_bounds = array<i64: 8, 128>}]} {
    %c0 = arith.constant 0 : index
    %c0_0 = arith.constant 0 : index
    %0 = vector.load %arg1[%c0, %c0_0] : memref<8x32xbf16, #tpu.memory_space<vmem>>, vector<8x32xbf16>
    %c0_1 = arith.constant 0 : index
    %c0_2 = arith.constant 0 : index
    %c0_3 = arith.constant 0 : index
    %1 = vector.load %arg2[%c0_1, %c0_2, %c0_3] : memref<3x32x128xbf16, #tpu.memory_space<vmem>>, vector<1x32x128xbf16>
    %2 = vector.shape_cast %1 : vector<1x32x128xbf16> to vector<32x128xbf16>
    %cst = arith.constant dense<0.000000e+00> : vector<8x128xf32>
    %3 = tpu.matmul %0, %2, %cst {dimension_numbers = #tpu.dot_dimension_numbers<[1], [0], [0], [1], [0, 0, 1, 1], [], []>} : vector<8x32xbf16>, vector<32x128xbf16>, vector<8x128xf32> -> vector<8x128xf32>
    %c1 = arith.constant 1 : index
    %c0_4 = arith.constant 0 : index
    %c0_5 = arith.constant 0 : index
    %4 = vector.load %arg2[%c1, %c0_4, %c0_5] : memref<3x32x128xbf16, #tpu.memory_space<vmem>>, vector<1x32x128xbf16>
    %5 = vector.shape_cast %4 : vector<1x32x128xbf16> to vector<32x128xbf16>
    %cst_6 = arith.constant dense<0.000000e+00> : vector<8x128xf32>
    %6 = tpu.matmul %0, %5, %cst_6 {dimension_numbers = #tpu.dot_dimension_numbers<[1], [0], [0], [1], [0, 0, 1, 1], [], []>} : vector<8x32xbf16>, vector<32x128xbf16>, vector<8x128xf32> -> vector<8x128xf32>
    %7 = arith.maximumf %3, %6 : vector<8x128xf32>
    %c2 = arith.constant 2 : index
    %c0_7 = arith.constant 0 : index
    %c0_8 = arith.constant 0 : index
    %8 = vector.load %arg2[%c2, %c0_7, %c0_8] : memref<3x32x128xbf16, #tpu.memory_space<vmem>>, vector<1x32x128xbf16>
    %9 = vector.shape_cast %8 : vector<1x32x128xbf16> to vector<32x128xbf16>
    %cst_9 = arith.constant dense<0.000000e+00> : vector<8x128xf32>
    %10 = tpu.matmul %0, %9, %cst_9 {dimension_numbers = #tpu.dot_dimension_numbers<[1], [0], [0], [1], [0, 0, 1, 1], [], []>} : vector<8x32xbf16>, vector<32x128xbf16>, vector<8x128xf32> -> vector<8x128xf32>
    %11 = arith.maximumf %7, %10 : vector<8x128xf32>
    %c0_10 = arith.constant 0 : index
    %c0_11 = arith.constant 0 : index
    %12 = vector.load %arg3[%c0_10, %c0_11] : memref<8x128xf32, #tpu.memory_space<vmem>>, vector<8x128xf32>
    tpu.vector_store %arg3[%c0_10, %c0_11], %11 {strides = array<i32>} : memref<8x128xf32, #tpu.memory_space<vmem>>, vector<8x128xf32>,
    return
  }
  func.func @transform_0(%arg0: i32) -> (i32, i32) {
    %c0_i32 = arith.constant 0 : i32
    %c0_i32_0 = arith.constant 0 : i32
    %c0_i32_1 = arith.constant 0 : i32
    return %c0_i32, %c0_i32_0 : i32, i32
  }
  func.func @transform_1(%arg0: i32) -> (i32, i32, i32) {
    %c0_i32 = arith.constant 0 : i32
    %c0_i32_0 = arith.constant 0 : i32
    %c0_i32_1 = arith.constant 0 : i32
    return %c0_i32, %c0_i32_0, %arg0 : i32, i32, i32
  }
  func.func @transform_2(%arg0: i32) -> (i32, i32) {
    %c0_i32 = arith.constant 0 : i32
    %c0_i32_0 = arith.constant 0 : i32
    return %c0_i32, %arg0 : i32, i32
  }
}

</mosaic_0001>

<llo_original>
// kernel: tpu_custom_call.1
$region0: #{tpu_custom_call.1}
  #allocation0 [shape = 'u32[]', space=smem, size = 0x4, offset = 0x4, fixed_abs, tag = 'smem constant byte address 0x4 - core index']
  #allocation1 [shape = 'u32[144,128]{1,0:T(1,128)}', space=vmem, size = 0x12000, scoped, tag = 'internal scratch']
  %s0 = inlined_call_operand.hbm [shape: bf16[8,32], index: 0, kind: input, shape index: {}]
  %s1 = inlined_call_operand.hbm [shape: bf16[3,32,128], index: 1, kind: input, shape index: {}]
  %s2 = inlined_call_operand.hbm [shape: f32[8,128], index: 2, kind: output, shape index: {}]
  %s3 = sld [smem:[#allocation0]]
  $region26: #{tpu_custom_call.1} parent=0
    _
  %s5 = ssub.s32 1, %s3
  %s6 = scalar_select 0, %s5, %s3
  $region1: #{tpu_custom_call.1} parent=0
    #allocation2 [shape = 'u8[2048]{0}', space=vmem, size = 0x800, scoped, tag = 'input window, operand 0, single buffered']
    #allocation3 [shape = 's32[1]{0}', space=sflag, size = 0x4, scoped, tag = 'scoped memory for tpu_custom_call.1']
    #allocation4 [shape = 's32[1]{0}', space=sflag, size = 0x4, scoped, tag = 'scoped memory for tpu_custom_call.1']
    #allocation5 [shape = 'u8[24576]{0}', space=vmem, size = 0x6000, scoped, tag = 'input window, operand 1, single buffered']
    #allocation6 [shape = 's32[1]{0}', space=sflag, size = 0x4, scoped, tag = 'scoped memory for tpu_custom_call.1']
    #allocation7 [shape = 'u8[4096]{0}', space=vmem, size = 0x1000, scoped, tag = 'output window, operand 0, single buffered']
    %7 = vsyncpa [#allocation3], 0
    %8 = vsyncpa [#allocation6], 0
    %9 = vsyncpa [#allocation4], 0
    // Predicated region
    $region2: #{tpu_custom_call.1} parent=1 // pred_check
      _
    $region3: #{tpu_custom_call.1} parent=1 // pred_check_branch
      %11 = sbr.rel (0) target = $region5
    $region4: #{tpu_custom_call.1} parent=1 // pred_region
      %s13 = ssub.s32 64, 64
      %14 = vsyncadd [#allocation3], %s13
      %s16 = sshll.u32 [#allocation2], 4
      %s17 = int_to_ptr.vmem [resolvable:$true] %s16
      %19 = dma.hbm_to_vmem [thread:$0]  %s0, 64, %s17, [#allocation3]
    $region5: #{tpu_custom_call.1} parent=1 // pred_fallthru
      _
    // Predicated region
    $region6: #{tpu_custom_call.1} parent=1 // pred_check
      _
    $region7: #{tpu_custom_call.1} parent=1 // pred_check_branch
      %21 = sbr.rel (0) target = $region9
    $region8: #{tpu_custom_call.1} parent=1 // pred_region
      %s23 = ssub.s32 768, 768
      %24 = vsyncadd [#allocation6], %s23
      %s25 = sshll.u32 [#allocation5], 4
      %s26 = int_to_ptr.vmem [resolvable:$true] %s25
      %31 = dma.hbm_to_vmem [thread:$0]  %s1, 768, %s26, [#allocation6], 64, 64, 4
    $region9: #{tpu_custom_call.1} parent=1 // pred_fallthru
      _
    // Predicated region
    $region10: #{tpu_custom_call.1} parent=1 // pred_check
      _
    $region11: #{tpu_custom_call.1} parent=1 // pred_check_branch
      %33 = sbr.rel (0) target = $region13
    $region12: #{tpu_custom_call.1} parent=1 // pred_region
      %34 = dma.done [#allocation3], 64
    $region13: #{tpu_custom_call.1} parent=1 // pred_fallthru
      _
    // Predicated region
    $region14: #{tpu_custom_call.1} parent=1 // pred_check
      _
    $region15: #{tpu_custom_call.1} parent=1 // pred_check_branch
      %36 = sbr.rel (0) target = $region17
    $region16: #{tpu_custom_call.1} parent=1 // pred_region
      %37 = dma.done [#allocation6], 768
    $region17: #{tpu_custom_call.1} parent=1 // pred_fallthru
      _
    %v39 = vld [vmem:[#allocation2] sm:$0xf]
    %v40 = vld [vmem:[#allocation5] sm:$0xf]
    %v41 = vld [vmem:[#allocation5 + $0x4] sm:$0xf]
    %v42 = vld [vmem:[#allocation5 + $0x8] sm:$0xf]
    %v43 = vld [vmem:[#allocation5 + $0xc] sm:$0xf]
    %v48 = vunpack.c.l.b16 %v40
    %v49 = vunpack.c.l.b16 %v41
    %v50 = vunpack.c.l.b16 %v42
    %v51 = vunpack.c.l.b16 %v43
    %v52 = vpack.c.b16 %v49, %v48
    %v53 = vpack.c.b16 %v51, %v50
    %vm56 = vcmask 261120
    %v58 = vsel %vm56, %v39, 0
    %60 = vmatprep.subr.bf16.mxu0 0
    %61 = vmatpush1.bf16.msra.mxu0 0
    %62 = vmatprep.subr.bf16.mxu0 0
    %63 = vmatpush1.bf16.msra.mxu0 0
    %64 = vmatprep.subr.bf16.mxu0 0
    %65 = vmatpush1.bf16.msra.mxu0 0
    %66 = vmatprep.subr.bf16.mxu0 0
    %67 = vmatpush1.bf16.msra.mxu0 0
    %68 = vmatprep.subr.bf16.mxu0 0
    %69 = vmatpush1.bf16.msra.mxu0 0
    %70 = vmatprep.subr.bf16.mxu0 0
    %71 = vmatpush1.bf16.msra.mxu0 0
    %72 = vmatprep.subr.bf16.mxu0 0
    %73 = vmatpush1.bf16.msra.mxu0 %v53
    %74 = vmatprep.subr.bf16.mxu0 0
    %75 = vmatpush1.bf16.msra.mxu0 %v52
    %76 = vmatprep.subr.bf16.mxu0 0
    %77 = vmatpush2.bf16.msra.mxu0 0
    %78 = vmatprep.subr.bf16.mxu0 0
    %79 = vmatpush2.bf16.msra.mxu0 0
    %80 = vmatprep.subr.bf16.mxu0 0
    %81 = vmatpush2.bf16.msra.mxu0 0
    %82 = vmatprep.subr.bf16.mxu0 0
    %83 = vmatpush2.bf16.msra.mxu0 0
    %84 = vmatprep.subr.bf16.mxu0 0
    %85 = vmatpush2.bf16.msra.mxu0 0
    %86 = vmatprep.subr.bf16.mxu0 0
    %87 = vmatpush2.bf16.msra.mxu0 0
    %88 = vmatprep.subr.bf16.mxu0 0
    %89 = vmatpush2.bf16.msra.mxu0 0
    %90 = vmatprep.subr.bf16.mxu0 0
    %91 = vmatpush2.bf16.msra.mxu0 0
    %92 = vmatprep.mubr.bf16.mxu0 0
    %93 = vmatmul.mubr.bf16.gmra.mxu0 %v58
    %v94 = vpop.f32.mrf.mxu0
    %v95 = vadd.f32 0.0, %v94
    %v96 = vpop.f32.mrf.mxu0
    %v97 = vpop.f32.mrf.mxu0
    %v98 = vpop.f32.mrf.mxu0
    %99 = vdwg.mxu0
    %s100 = scalar_lea.vmem [#allocation5], 16
    %v101 = vld [vmem:[%s100] sm:$0xf]
    %v102 = vld [vmem:[%s100 + $0x4] sm:$0xf]
    %v103 = vld [vmem:[%s100 + $0x8] sm:$0xf]
    %v104 = vld [vmem:[%s100 + $0xc] sm:$0xf]
    %v109 = vunpack.c.l.b16 %v101
    %v110 = vunpack.c.l.b16 %v102
    %v111 = vunpack.c.l.b16 %v103
    %v112 = vunpack.c.l.b16 %v104
    %v113 = vpack.c.b16 %v110, %v109
    %v114 = vpack.c.b16 %v112, %v111
    %117 = vmatprep.subr.bf16.mxu0 0
    %118 = vmatpush1.bf16.msra.mxu0 0
    %119 = vmatprep.subr.bf16.mxu0 0
    %120 = vmatpush1.bf16.msra.mxu0 0
    %121 = vmatprep.subr.bf16.mxu0 0
    %122 = vmatpush1.bf16.msra.mxu0 0
    %123 = vmatprep.subr.bf16.mxu0 0
    %124 = vmatpush1.bf16.msra.mxu0 0
    %125 = vmatprep.subr.bf16.mxu0 0
    %126 = vmatpush1.bf16.msra.mxu0 0
    %127 = vmatprep.subr.bf16.mxu0 0
    %128 = vmatpush1.bf16.msra.mxu0 0
    %129 = vmatprep.subr.bf16.mxu0 0
    %130 = vmatpush1.bf16.msra.mxu0 %v114
    %131 = vmatprep.subr.bf16.mxu0 0
    %132 = vmatpush1.bf16.msra.mxu0 %v113
    %133 = vmatprep.subr.bf16.mxu0 0
    %134 = vmatpush2.bf16.msra.mxu0 0
    %135 = vmatprep.subr.bf16.mxu0 0
    %136 = vmatpush2.bf16.msra.mxu0 0
    %137 = vmatprep.subr.bf16.mxu0 0
    %138 = vmatpush2.bf16.msra.mxu0 0
    %139 = vmatprep.subr.bf16.mxu0 0
    %140 = vmatpush2.bf16.msra.mxu0 0
    %141 = vmatprep.subr.bf16.mxu0 0
    %142 = vmatpush2.bf16.msra.mxu0 0
    %143 = vmatprep.subr.bf16.mxu0 0
    %144 = vmatpush2.bf16.msra.mxu0 0
    %145 = vmatprep.subr.bf16.mxu0 0
    %146 = vmatpush2.bf16.msra.mxu0 0
    %147 = vmatprep.subr.bf16.mxu0 0
    %148 = vmatpush2.bf16.msra.mxu0 0
    %149 = vmatprep.mubr.bf16.mxu0 0
    %150 = vmatmul.mubr.bf16.gmra.mxu0 %v58
    %v151 = vpop.f32.mrf.mxu0
    %v152 = vadd.f32 0.0, %v151
    %v153 = vpop.f32.mrf.mxu0
    %v154 = vpop.f32.mrf.mxu0
    %v155 = vpop.f32.mrf.mxu0
    %156 = vdwg.mxu0
    %v157 = vmax.f32 %v95, %v152
    %s158 = scalar_lea.vmem [#allocation5], 32
    %v159 = vld [vmem:[%s158] sm:$0xf]
    %v160 = vld [vmem:[%s158 + $0x4] sm:$0xf]
    %v161 = vld [vmem:[%s158 + $0x8] sm:$0xf]
    %v162 = vld [vmem:[%s158 + $0xc] sm:$0xf]
    %v167 = vunpack.c.l.b16 %v159
    %v168 = vunpack.c.l.b16 %v160
    %v169 = vunpack.c.l.b16 %v161
    %v170 = vunpack.c.l.b16 %v162
    %v171 = vpack.c.b16 %v168, %v167
    %v172 = vpack.c.b16 %v170, %v169
    %175 = vmatprep.subr.bf16.mxu0 0
    %176 = vmatpush1.bf16.msra.mxu0 0
    %177 = vmatprep.subr.bf16.mxu0 0
    %178 = vmatpush1.bf16.msra.mxu0 0
    %179 = vmatprep.subr.bf16.mxu0 0
    %180 = vmatpush1.bf16.msra.mxu0 0
    %181 = vmatprep.subr.bf16.mxu0 0
    %182 = vmatpush1.bf16.msra.mxu0 0
    %183 = vmatprep.subr.bf16.mxu0 0
    %184 = vmatpush1.bf16.msra.mxu0 0
    %185 = vmatprep.subr.bf16.mxu0 0
    %186 = vmatpush1.bf16.msra.mxu0 0
    %187 = vmatprep.subr.bf16.mxu0 0
    %188 = vmatpush1.bf16.msra.mxu0 %v172
    %189 = vmatprep.subr.bf16.mxu0 0
    %190 = vmatpush1.bf16.msra.mxu0 %v171
    %191 = vmatprep.subr.bf16.mxu0 0
    %192 = vmatpush2.bf16.msra.mxu0 0
    %193 = vmatprep.subr.bf16.mxu0 0
    %194 = vmatpush2.bf16.msra.mxu0 0
    %195 = vmatprep.subr.bf16.mxu0 0
    %196 = vmatpush2.bf16.msra.mxu0 0
    %197 = vmatprep.subr.bf16.mxu0 0
    %198 = vmatpush2.bf16.msra.mxu0 0
    %199 = vmatprep.subr.bf16.mxu0 0
    %200 = vmatpush2.bf16.msra.mxu0 0
    %201 = vmatprep.subr.bf16.mxu0 0
    %202 = vmatpush2.bf16.msra.mxu0 0
    %203 = vmatprep.subr.bf16.mxu0 0
    %204 = vmatpush2.bf16.msra.mxu0 0
    %205 = vmatprep.subr.bf16.mxu0 0
    %206 = vmatpush2.bf16.msra.mxu0 0
    %207 = vmatprep.mubr.bf16.mxu0 0
    %208 = vmatmul.mubr.bf16.gmra.mxu0 %v58
    %v209 = vpop.f32.mrf.mxu0
    %v210 = vadd.f32 0.0, %v209
    %v211 = vpop.f32.mrf.mxu0
    %v212 = vpop.f32.mrf.mxu0
    %v213 = vpop.f32.mrf.mxu0
    %214 = vdwg.mxu0
    %v215 = vmax.f32 %v157, %v210
    %216 = vst [vmem:[#allocation7] sm:$0xff] %v215
    // Predicated region
    $region18: #{tpu_custom_call.1} parent=1 // pred_check
      _
    $region19: #{tpu_custom_call.1} parent=1 // pred_check_branch
      %218 = sbr.rel (0) target = $region21
    $region20: #{tpu_custom_call.1} parent=1 // pred_region
      %s220 = ssub.s32 128, 128
      %221 = vsyncadd [#allocation4], %s220
      %s223 = sshll.u32 [#allocation7], 4
      %s224 = int_to_ptr.vmem [resolvable:$true] %s223
      %226 = dma.vmem_to_hbm [thread:$0]  %s224, 128, %s2, [#allocation4]
    $region21: #{tpu_custom_call.1} parent=1 // pred_fallthru
      _
    // Predicated region
    $region22: #{tpu_custom_call.1} parent=1 // pred_check
      _
    $region23: #{tpu_custom_call.1} parent=1 // pred_check_branch
      %228 = sbr.rel (0) target = $region25
    $region24: #{tpu_custom_call.1} parent=1 // pred_region
      %229 = dma.done [#allocation4], 128
    $region25: #{tpu_custom_call.1} parent=1 // pred_fallthru
      _
    %230 = vsyncpa [#allocation3], 1
    %231 = vsyncpa [#allocation6], 1
    %232 = vsyncpa [#allocation4], 1

</llo_original>
